<compile_context>
chip_gen: v6e
topology: v6e:2x2x1
jax: 0.10.0
libtpu: 0.0.40
codegen_flags: <defaults>
</compile_context>

<pallas_src>
import math

import jax
import jax.numpy as jnp
from jax.experimental import pallas as pl
from jax.experimental.pallas import tpu as pltpu


def _round_up(n, m):
    return ((n + m - 1) // m) * m


def _sincos_kernel(x_ref, w_ref, o_ref):
    """One B-tile of the Fourier features.

    x_ref : (TB, 1)    f32   timestep scalars
    w_ref : (1, H)     f32   module weights (unscaled)
    o_ref : (TB, 2*H)  f32   [sin | cos]  (lane-aligned, sin starts at lane 0)
    """
    x = x_ref[...]                              # (TB, 1)
    w = w_ref[...]                              # (1, H)
    # Same left-to-right op order as the reference: ((x*w)*2.0)*pi
    freqs = x * w * 2.0 * math.pi               # (TB, H)
    o_ref[...] = jnp.concatenate([jnp.sin(freqs), jnp.cos(freqs)], axis=-1)


def _choose_row_tile(b, cap=8192):
    """Row tile: multiple of 8, <= cap, >= 2 grid steps when B is large enough
    (so the 'parallel' axis actually uses both v7x TensorCores), and a pad
    tail of < 8 rows."""
    b8 = _round_up(max(b, 1), 8)
    if b8 <= 8:
        return b8
    n_steps = max(2, pl.cdiv(b8, cap))
    return _round_up(pl.cdiv(b8, n_steps), 8)


def random_or_learned_sinusoidal_pos_emb(x, weights, *, max_block_rows=8192):
    """x: (B,) f32 timesteps, weights: (half_dim,) f32 module parameter.

    Returns (B, 1 + 2*half_dim) f32 == PyTorch forward output
    ([x | sin | cos]).
    """
    x = x.astype(jnp.float32)
    weights = weights.astype(jnp.float32)

    b = x.shape[0]
    half_dim = weights.shape[0]
    out_dim = 2 * half_dim                      # kernel emits [sin|cos] only

    tb = _choose_row_tile(b, cap=max_block_rows)
    bp = _round_up(b, tb)

    # Glue reshapes / minimal padding in plain JAX (outside the kernel loop).
    x_col = x.reshape(b, 1)
    x2 = x_col if bp == b else jnp.pad(x_col, ((0, bp - b), (0, 0)))
    w2 = weights.reshape(1, half_dim)

    grid = (pl.cdiv(bp, tb),)

    sincos = pl.pallas_call(
        _sincos_kernel,
        out_shape=jax.ShapeDtypeStruct((bp, out_dim), jnp.float32),
        grid=grid,
        in_specs=[
            pl.BlockSpec((tb, 1), lambda i: (i, 0)),
            # Same block index every step -> weights stay resident in VMEM.
            pl.BlockSpec((1, half_dim), lambda i: (0, 0)),
        ],
        out_specs=pl.BlockSpec((tb, out_dim), lambda i: (i, 0)),
        compiler_params=pltpu.CompilerParams(
            dimension_semantics=("parallel",),
            vmem_limit_bytes=32 * 1024 * 1024,
        ),
    )(x2, w2)

    if bp != b:
        sincos = sincos[:b]
    # Prepend the raw x column outside the kernel (keeps the kernel store
    # lane-aligned; this concat fuses into the consumer under XLA).
    return jnp.concatenate([x_col, sincos], axis=-1)


def reference(x, weights):
    """Pure-JAX reference matching the PyTorch module."""
    x2 = x.astype(jnp.float32)[:, None]
    freqs = x2 * weights.astype(jnp.float32)[None, :] * 2.0 * math.pi
    return jnp.concatenate([x2, jnp.sin(freqs), jnp.cos(freqs)], axis=-1)


if __name__ == "__main__":
    key = jax.random.PRNGKey(0)
    k_w, k_x = jax.random.split(key)

    dim = 32                    # module arg; must be even
    half_dim = dim // 2
    batch = 8

    # Parameter init (matches nn.Parameter(torch.randn(half_dim)) shape).
    weights = jax.random.normal(k_w, (half_dim,), dtype=jnp.float32)

    # Timestep-like input: (B,) scalars.
    x = jax.random.uniform(k_x, (batch,), dtype=jnp.float32) * 10.0

    out = random_or_learned_sinusoidal_pos_emb(x, weights)
    out = jax.block_until_ready(out)

    ref = reference(x, weights)
    assert out.shape == (batch, dim + 1), out.shape
    # Arguments to sin/cos match the reference op-for-op; tolerance covers
    # only implementation-level (ulp) differences in the sin/cos polynomials.
    assert jnp.allclose(out, ref, atol=1e-4, rtol=1e-4), "mismatch vs reference"

    print("KERNEL_OK")
</pallas_src>

<mosaic_0001>
module attributes {stable_mosaic.version = 11 : i64} {
  func.func @_sincos_kernel(%arg0: i32, %arg1: memref<8x1xf32, #tpu.memory_space<vmem>>, %arg2: memref<1x16xf32, #tpu.memory_space<vmem>>, %arg3: memref<8x32xf32, #tpu.memory_space<vmem>>) attributes {dimension_semantics = [#tpu.dimension_semantics<parallel>], iteration_bounds = array<i64: 1>, scalar_prefetch = 0 : i64, scratch_operands = 0 : i64, tpu.core_type = #tpu.core_type<tc>, window_params = [{transform_indices = @transform_0, window_bounds = array<i64: 8, 1>}, {pipeline_mode = #tpu.pipeline_mode<synchronous>, transform_indices = @transform_1, window_bounds = array<i64: 1, 16>}, {transform_indices = @transform_2, window_bounds = array<i64: 8, 32>}]} {
    %c0 = arith.constant 0 : index
    %c0_0 = arith.constant 0 : index
    %0 = vector.load %arg1[%c0, %c0_0] : memref<8x1xf32, #tpu.memory_space<vmem>>, vector<8x1xf32>
    %c0_1 = arith.constant 0 : index
    %c0_2 = arith.constant 0 : index
    %1 = vector.load %arg2[%c0_1, %c0_2] : memref<1x16xf32, #tpu.memory_space<vmem>>, vector<1x16xf32>
    %2 = vector.broadcast %0 : vector<8x1xf32> to vector<8x16xf32>
    %3 = vector.broadcast %1 : vector<1x16xf32> to vector<8x16xf32>
    %4 = arith.mulf %2, %3 : vector<8x16xf32>
    %cst = arith.constant 2.000000e+00 : f32
    %5 = vector.broadcast %cst : f32 to vector<8x16xf32>
    %6 = arith.mulf %4, %5 : vector<8x16xf32>
    %cst_3 = arith.constant 3.14159274 : f32
    %7 = vector.broadcast %cst_3 : f32 to vector<8x16xf32>
    %8 = arith.mulf %6, %7 : vector<8x16xf32>
    %9 = math.sin %8 : vector<8x16xf32>
    %10 = math.cos %8 : vector<8x16xf32>
    %11 = tpu.concatenate %9, %10 in 1 : vector<8x16xf32>, vector<8x16xf32> -> vector<8x32xf32>
    %c0_4 = arith.constant 0 : index
    %c0_5 = arith.constant 0 : index
    %12 = vector.load %arg3[%c0_4, %c0_5] : memref<8x32xf32, #tpu.memory_space<vmem>>, vector<8x32xf32>
    tpu.vector_store %arg3[%c0_4, %c0_5], %11 {strides = array<i32>} : memref<8x32xf32, #tpu.memory_space<vmem>>, vector<8x32xf32>,
    return
  }
  func.func @transform_0(%arg0: i32) -> (i32, i32) {
    %c0_i32 = arith.constant 0 : i32
    %c0_i32_0 = arith.constant 0 : i32
    return %arg0, %c0_i32 : i32, i32
  }
  func.func @transform_1(%arg0: i32) -> (i32, i32) {
    %c0_i32 = arith.constant 0 : i32
    %c0_i32_0 = arith.constant 0 : i32
    %c0_i32_1 = arith.constant 0 : i32
    return %c0_i32, %c0_i32_0 : i32, i32
  }
  func.func @transform_2(%arg0: i32) -> (i32, i32) {
    %c0_i32 = arith.constant 0 : i32
    %c0_i32_0 = arith.constant 0 : i32
    return %arg0, %c0_i32 : i32, i32
  }
}

</mosaic_0001>

<llo_original>
// kernel: tpu_custom_call.1
$region0: #{tpu_custom_call.1}
  #allocation0 [shape = 'u32[]', space=smem, size = 0x4, offset = 0x4, fixed_abs, tag = 'smem constant byte address 0x4 - core index']
  #allocation1 [shape = 'u32[144,128]{1,0:T(1,128)}', space=vmem, size = 0x12000, scoped, tag = 'internal scratch']
  %s0 = inlined_call_operand.vmem [shape: f32[8,1], index: 0, kind: input, shape index: {}]
  %s1 = inlined_call_operand.vmem [shape: f32[1,16], index: 1, kind: input, shape index: {}]
  %s2 = inlined_call_operand.hbm [shape: f32[8,32], index: 2, kind: output, shape index: {}]
  %s3 = sld [smem:[#allocation0]]
  $region18: #{tpu_custom_call.1} parent=0
    _
  %s5 = ssub.s32 1, %s3
  %s6 = scalar_select 0, %s5, %s3
  $region1: #{tpu_custom_call.1} parent=0
    #allocation2 [shape = 'u8[4096]{0}', space=vmem, size = 0x1000, scoped, tag = 'output window, operand 0, single buffered']
    #allocation3 [shape = 's32[1]{0}', space=sflag, size = 0x4, scoped, tag = 'scoped memory for tpu_custom_call.1']
    %7 = vsyncpa [#allocation3], 0
    // Predicated region
    $region2: #{tpu_custom_call.1} parent=1 // pred_check
      _
    $region3: #{tpu_custom_call.1} parent=1 // pred_check_branch
      %9 = sbr.rel (0) target = $region5
    $region4: #{tpu_custom_call.1} parent=1 // pred_region
      _
    $region5: #{tpu_custom_call.1} parent=1 // pred_fallthru
      _
    // Predicated region
    $region6: #{tpu_custom_call.1} parent=1 // pred_check
      _
    $region7: #{tpu_custom_call.1} parent=1 // pred_check_branch
      %11 = sbr.rel (0) target = $region9
    $region8: #{tpu_custom_call.1} parent=1 // pred_region
      _
    $region9: #{tpu_custom_call.1} parent=1 // pred_fallthru
      _
    %v12 = vld [vmem:[%s0] sm:$0xff]
    %v13 = vld [vmem:[%s1] sm:$0x1]
    %15 = vset.pattern.permute.xlu0 0
    %16 = vperm.xlu0 %15, %v12
    %v17 = vpop.permute.xlu0 %16
    %v20 = vlaneseq
    %v21 = vshrl.u32 %v20, 7
    %v22 = vsub.s32 0, %v21
    %v23 = vrot.slane %v13, %v22
    %v25 = vmul.f32 %v17, %v23
    %v26 = vmul.f32 %v25, 2.0
    %v27 = vmul.f32 %v26, 3.1415927
    %v28 = vand.u32 2147483647, %v27
    %vm29 = vcmp.le.f32.partialorder %v28, 0.7853982
    %vm30 = vcmp.lt.s32.totalorder %v27, 0
    %v31 = vand.u32 %v27, 2139095040
    %v32 = vshrl.u32 %v31, 23
    %v33 = vsub.s32 %v32, 127
    %v34 = vand.u32 2147483647, %v27
    %v35 = vand.u32 %v34, 8388607
    %v36 = vor.u32 %v35, 8388608
    %v37 = vsub.s32 0, %v36
    %v38 = vadd.s32 %v33, 1
    %vm39 = vcmp.gt.s32.totalorder %v38, 0
    %v40 = vsel %vm39, %v38, 0
    %v41 = vshrl.u32 %v40, 5
    %v42 = vand.u32 %v40, 31
    %v43 = vsub.s32 32, %v42
    %v44 = vshrl.u32 683565275, %v43
    %v45 = vshll.u32 683565275, %v42
    %v46 = vshrl.u32 2475754826, %v43
    %v47 = vor.u32 %v45, %v46
    %v48 = vshll.u32 2475754826, %v42
    %v49 = vshrl.u32 2131351028, %v43
    %v50 = vor.u32 %v48, %v49
    %v51 = vshll.u32 2131351028, %v42
    %v52 = vshrl.u32 2102212464, %v43
    %v53 = vor.u32 %v51, %v52
    %v54 = vshll.u32 2102212464, %v42
    %v55 = vshrl.u32 920167782, %v43
    %v56 = vor.u32 %v54, %v55
    %v57 = vshll.u32 920167782, %v42
    %v58 = vshrl.u32 1326507024, %v43
    %v59 = vor.u32 %v57, %v58
    %vm60 = vcmp.lt.s32.totalorder %v41, 1
    %vm61 = vcmp.lt.s32.totalorder %v41, 2
    %vm62 = vcmp.lt.s32.totalorder %v41, 3
    %vm63 = vcmp.lt.s32.totalorder %v41, 4
    %v64 = vsel %vm60, %v44, %v47
    %v65 = vsel %vm63, %v53, 2102212464
    %v66 = vsel %vm62, %v50, %v65
    %v67 = vsel %vm61, %v64, %v66
    %v68 = vsel %vm60, %v47, %v50
    %v69 = vsel %vm63, %v56, 920167782
    %v70 = vsel %vm62, %v53, %v69
    %v71 = vsel %vm61, %v68, %v70
    %v72 = vsel %vm60, %v50, %v53
    %v73 = vsel %vm63, %v59, 1326507024
    %v74 = vsel %vm62, %v56, %v73
    %v75 = vsel %vm61, %v72, %v74
    %v76 = vshll.u32 %v36, 8
    %v77 = vmul.u32.u64.compose %v76, %v75
    %v78 = vextract.low.u32 %v77
    %v79 = vextract.high.u32 %v77
    %v80 = vmul.u32.u64.compose %v76, %v71
    %v81 = vextract.low.u32 %v80
    %v82 = vextract.high.u32 %v80
    %v83 = vmul.u32 %v76, %v67
    %v84 = vadd.s32 %v79, %v81
    %vm85 = vc.u32 %v79, %v81
    %v86 = vadd.s32 %v82, 1
    %v87 = vsel %vm85, %v86, %v82
    %v88 = vadd.s32 %v83, %v87
    %v89 = vadd.s32 %v88, 536870912
    %v90 = vshrl.u32 %v89, 30
    %v91 = vshll.u32 %v90, 30
    %v92 = vsub.s32 %v88, %v91
    %vm93 = vcmp.lt.s32.totalorder %v92, 0
    %v94 = vsub.s32 0, %v92
    %v95 = vsel %vm93, %v94, %v92
    %v96 = vclz %v95
    %v97 = vsub.s32 %v96, 2
    %vm98 = vcmp.gt.s32.totalorder 0, %v97
    %v99 = vsel %vm98, 0, %v97
    %v100 = vsub.s32 32, %v99
    %v101 = vshll.u32 %v92, %v99
    %v102 = vshrl.u32 %v84, %v100
    %v103 = vor.u32 %v101, %v102
    %v104 = vsub.s32 4294967266, %v99
    %v105 = vadd.s32 %v104, 127
    %v106 = vshll.u32 %v105, 23
    %v107 = vor.u32 4788187, %v106
    %v108 = vand.u32 2147483647, %v107
    %v110 = vcvt.s32.f32 %v103
    %v111 = vmul.f32 %v110, %v108
    %v112 = vxor.u32 %v111, 2147483648
    %v113 = vsel %vm30, %v112, %v111
    %v114 = vsub.s32 4, %v90
    %v115 = vsel %vm30, %v114, %v90
    %v116 = vsel %vm29, %v27, %v113
    %v117 = vsel %vm29, 0, %v115
    %v118 = vcosq.f32.pop %v116
    %v119 = vsinq.f32.pop %v116
    %vm120 = vweird.f32 %v27
    %v121 = vadd.s32 %v117, 3
    %v122 = vand.u32 %v121, 3
    %vm123 = vcmp.lt.s32.totalorder %v122, 2
    %vm124 = vcmp.eq.s32.totalorder %v122, 0
    %v125 = vxor.u32 %v119, 2147483648
    %v126 = vsel %vm124, %v118, %v125
    %vm127 = vcmp.eq.s32.totalorder %v122, 2
    %v128 = vxor.u32 %v118, 2147483648
    %v129 = vsel %vm127, %v128, %v119
    %v130 = vsel %vm123, %v126, %v129
    %v131 = vsel %vm120, nan, %v130
    %v132 = vand.u32 2147483647, %v27
    %vm133 = vcmp.le.f32.partialorder %v132, 0.7853982
    %vm134 = vcmp.lt.s32.totalorder %v27, 0
    %v135 = vand.u32 %v27, 2139095040
    %v136 = vshrl.u32 %v135, 23
    %v137 = vsub.s32 %v136, 127
    %v138 = vand.u32 2147483647, %v27
    %v139 = vand.u32 %v138, 8388607
    %v140 = vor.u32 %v139, 8388608
    %v141 = vsub.s32 0, %v140
    %v142 = vadd.s32 %v137, 1
    %vm143 = vcmp.gt.s32.totalorder %v142, 0
    %v144 = vsel %vm143, %v142, 0
    %v145 = vshrl.u32 %v144, 5
    %v146 = vand.u32 %v144, 31
    %v147 = vsub.s32 32, %v146
    %v148 = vshrl.u32 683565275, %v147
    %v149 = vshll.u32 683565275, %v146
    %v150 = vshrl.u32 2475754826, %v147
    %v151 = vor.u32 %v149, %v150
    %v152 = vshll.u32 2475754826, %v146
    %v153 = vshrl.u32 2131351028, %v147
    %v154 = vor.u32 %v152, %v153
    %v155 = vshll.u32 2131351028, %v146
    %v156 = vshrl.u32 2102212464, %v147
    %v157 = vor.u32 %v155, %v156
    %v158 = vshll.u32 2102212464, %v146
    %v159 = vshrl.u32 920167782, %v147
    %v160 = vor.u32 %v158, %v159
    %v161 = vshll.u32 920167782, %v146
    %v162 = vshrl.u32 1326507024, %v147
    %v163 = vor.u32 %v161, %v162
    %vm164 = vcmp.lt.s32.totalorder %v145, 1
    %vm165 = vcmp.lt.s32.totalorder %v145, 2
    %vm166 = vcmp.lt.s32.totalorder %v145, 3
    %vm167 = vcmp.lt.s32.totalorder %v145, 4
    %v168 = vsel %vm164, %v148, %v151
    %v169 = vsel %vm167, %v157, 2102212464
    %v170 = vsel %vm166, %v154, %v169
    %v171 = vsel %vm165, %v168, %v170
    %v172 = vsel %vm164, %v151, %v154
    %v173 = vsel %vm167, %v160, 920167782
    %v174 = vsel %vm166, %v157, %v173
    %v175 = vsel %vm165, %v172, %v174
    %v176 = vsel %vm164, %v154, %v157
    %v177 = vsel %vm167, %v163, 1326507024
    %v178 = vsel %vm166, %v160, %v177
    %v179 = vsel %vm165, %v176, %v178
    %v180 = vshll.u32 %v140, 8
    %v181 = vmul.u32.u64.compose %v180, %v179
    %v182 = vextract.low.u32 %v181
    %v183 = vextract.high.u32 %v181
    %v184 = vmul.u32.u64.compose %v180, %v175
    %v185 = vextract.low.u32 %v184
    %v186 = vextract.high.u32 %v184
    %v187 = vmul.u32 %v180, %v171
    %v188 = vadd.s32 %v183, %v185
    %vm189 = vc.u32 %v183, %v185
    %v190 = vadd.s32 %v186, 1
    %v191 = vsel %vm189, %v190, %v186
    %v192 = vadd.s32 %v187, %v191
    %v193 = vadd.s32 %v192, 536870912
    %v194 = vshrl.u32 %v193, 30
    %v195 = vshll.u32 %v194, 30
    %v196 = vsub.s32 %v192, %v195
    %vm197 = vcmp.lt.s32.totalorder %v196, 0
    %v198 = vsub.s32 0, %v196
    %v199 = vsel %vm197, %v198, %v196
    %v200 = vclz %v199
    %v201 = vsub.s32 %v200, 2
    %vm202 = vcmp.gt.s32.totalorder 0, %v201
    %v203 = vsel %vm202, 0, %v201
    %v204 = vsub.s32 32, %v203
    %v205 = vshll.u32 %v196, %v203
    %v206 = vshrl.u32 %v188, %v204
    %v207 = vor.u32 %v205, %v206
    %v208 = vsub.s32 4294967266, %v203
    %v209 = vadd.s32 %v208, 127
    %v210 = vshll.u32 %v209, 23
    %v211 = vor.u32 4788187, %v210
    %v212 = vand.u32 2147483647, %v211
    %v214 = vcvt.s32.f32 %v207
    %v215 = vmul.f32 %v214, %v212
    %v216 = vxor.u32 %v215, 2147483648
    %v217 = vsel %vm134, %v216, %v215
    %v218 = vsub.s32 4, %v194
    %v219 = vsel %vm134, %v218, %v194
    %v220 = vsel %vm133, %v27, %v217
    %v221 = vsel %vm133, 0, %v219
    %v222 = vcosq.f32.pop %v220
    %v223 = vsinq.f32.pop %v220
    %vm224 = vweird.f32 %v27
    %v225 = vand.u32 %v221, 3
    %vm226 = vcmp.lt.s32.totalorder %v225, 2
    %vm227 = vcmp.eq.s32.totalorder %v225, 0
    %v228 = vxor.u32 %v223, 2147483648
    %v229 = vsel %vm227, %v222, %v228
    %vm230 = vcmp.eq.s32.totalorder %v225, 2
    %v231 = vxor.u32 %v222, 2147483648
    %v232 = vsel %vm230, %v231, %v223
    %v233 = vsel %vm226, %v229, %v232
    %v234 = vsel %vm224, nan, %v233
    %236 = vrot.lane.b32.xlu0 %v234, 16
    %v237 = vpop.permute.xlu0 %236
    %vm239 = vcmask 130048
    %v240 = vsel %vm239, %v131, %v237
    %vm241 = vcmask 261120
    %242 = vst.msk [vmem:[#allocation2] sm:$0xff] %vm241, %v240
    // Predicated region
    $region10: #{tpu_custom_call.1} parent=1 // pred_check
      _
    $region11: #{tpu_custom_call.1} parent=1 // pred_check_branch
      %244 = sbr.rel (0) target = $region13
    $region12: #{tpu_custom_call.1} parent=1 // pred_region
      %s246 = ssub.s32 128, 128
      %247 = vsyncadd [#allocation3], %s246
      %s249 = sshll.u32 [#allocation2], 4
      %s250 = int_to_ptr.vmem [resolvable:$true] %s249
      %252 = dma.vmem_to_hbm [thread:$0]  %s250, 128, %s2, [#allocation3]
    $region13: #{tpu_custom_call.1} parent=1 // pred_fallthru
      _
    // Predicated region
    $region14: #{tpu_custom_call.1} parent=1 // pred_check
      _
    $region15: #{tpu_custom_call.1} parent=1 // pred_check_branch
      %254 = sbr.rel (0) target = $region17
    $region16: #{tpu_custom_call.1} parent=1 // pred_region
      %255 = dma.done [#allocation3], 128
    $region17: #{tpu_custom_call.1} parent=1 // pred_fallthru
      _
    %256 = vsyncpa [#allocation3], 1

</llo_original>
